<compile_context>
chip_gen: v7x
topology: tpu7x:2x2x1
jax: 0.10.0
libtpu: 0.0.40
codegen_flags: <defaults>
</compile_context>

<pallas_src>
import functools
import math

import jax
import jax.numpy as jnp
from jax.experimental import pallas as pl
from jax.experimental.pallas import tpu as pltpu


def _cw_loss_kernel(w_ref, x_ref, logits_ref, targets_ref, out_ref, *,
                    c, inv_n_pix, inv_n_batch, n_valid, tile_rows, chunk_rows,
                    inner_steps, total_tiles, has_ragged, has_virtual):
    lanes = 128
    s = pl.program_id(0)                  # split ("parallel" axis, one per TC on v7x)
    k = pl.program_id(1)                  # inner step within the split ("arbitrary")
    t = s * inner_steps + k               # global (virtual) tile index
    n_chunks = tile_rows // chunk_rows

    # Per-split resident accumulator lives directly in the output block.
    @pl.when(k == 0)
    def _init():
        out_ref[...] = jnp.zeros_like(out_ref)

    def tile_partial(masked):
        def chunk(j, acc, r0):
            # Upcast in-kernel (VPU cast) -- inputs keep their HBM dtype through the
            # BlockSpec, halving HBM traffic for 16-bit inputs.
            w_c = w_ref[pl.ds(r0, chunk_rows), :].astype(jnp.float32)
            x_c = x_ref[pl.ds(r0, chunk_rows), :].astype(jnp.float32)
            wt = 127.5 * (jnp.tanh(w_c) + 1.0)      # tanh -> EUP slot
            d = wt - x_c
            sq = d * d
            if masked:
                # Flat-index mask: zeroes the lane tail, row-ragged garbage rows and
                # any OOB data of the (clamped) last real tile.
                row = jax.lax.broadcasted_iota(jnp.int32, (chunk_rows, lanes), 0)
                lane = jax.lax.broadcasted_iota(jnp.int32, (chunk_rows, lanes), 1)
                flat = (t * tile_rows + r0 + row) * lanes + lane
                sq = jnp.where(flat < n_valid, sq, 0.0)
            # Layout-preserving reshape; axis-0 sum is vreg-wise VALU adds (no XLU).
            return acc + jnp.sum(sq.reshape(chunk_rows // 8, 8, lanes), axis=0)

        acc0 = jnp.zeros((8, lanes), jnp.float32)
        if n_chunks <= 8:
            acc = acc0
            for j in range(n_chunks):                # static offsets, fully unrolled
                acc = chunk(j, acc, j * chunk_rows)
        else:
            acc = jax.lax.fori_loop(
                0, n_chunks,
                lambda j, a: chunk(j, a, pl.multiple_of(j * chunk_rows, chunk_rows)),
                acc0, unroll=2)
        # Scale per tile (also helps accumulation precision).
        out_ref[...] += (acc * inv_n_pix)[None]

    # ---- loss1 accumulation, gated for ragged / virtual tiles ----
    if has_ragged:
        @pl.when(t < total_tiles - 1)
        def _full_tiles():
            tile_partial(False)

        @pl.when(t == total_tiles - 1)
        def _ragged_tile():
            tile_partial(True)
    elif has_virtual:
        @pl.when(t < total_tiles)
        def _real_tiles():
            tile_partial(False)
    else:
        tile_partial(False)

    # ---- loss2: tiny CW margin term, computed once (split 0, last inner step) ----
    @pl.when(jnp.logical_and(s == 0, k == inner_steps - 1))
    def _loss2():
        logits = logits_ref[...].astype(jnp.float32)             # (B, K)
        tgt = targets_ref[...]                                   # (B, 1) int32
        b, nk = logits.shape
        cols = jax.lax.broadcasted_iota(jnp.int32, (b, nk), 1)
        is_target = cols == tgt                                  # one-hot mask
        true_scores = jnp.sum(jnp.where(is_target, logits, 0.0),
                              axis=1, keepdims=True)             # gather(1, targets)
        max_others = jnp.max(jnp.where(is_target, jnp.float32(-jnp.inf), logits),
                             axis=1, keepdims=True)              # max over non-targets
        margin = jnp.maximum(true_scores - max_others, jnp.float32(-10.0))
        loss2 = (c * inv_n_batch) * jnp.sum(margin)              # scalar
        r_i = jax.lax.broadcasted_iota(jnp.int32, (1, 8, lanes), 1)
        l_i = jax.lax.broadcasted_iota(jnp.int32, (1, 8, lanes), 2)
        onehot = jnp.logical_and(r_i == 0, l_i == 0)
        out_ref[...] += jnp.where(onehot, loss2, 0.0)            # fold into slot [0,0,0]


def cw_loss(w, x, logits, targets, c=0.5, tile_rows=8192, n_splits=2):
    """Pallas implementation of CustomLossFunction.forward."""
    assert w.shape == x.shape
    lanes = 128
    n = int(w.size)
    assert n > 0

    w_item = jnp.dtype(w.dtype).itemsize
    x_item = jnp.dtype(x.dtype).itemsize
    # Sublane packing: 32-bit -> 8 rows/vreg, 16-bit -> 16, 8-bit -> 32.
    row_align = max(8 * (4 // min(w_item, 4)), 8 * (4 // min(x_item, 4)))

    # Lane-dense flat view; only a <128-element tail is ever padded (values are
    # irrelevant -- the in-kernel mask zeroes their contribution).
    wf = w.reshape(-1)
    xf = x.reshape(-1)
    lane_pad = (-n) % lanes
    if lane_pad:
        wf = jnp.concatenate([wf, jnp.zeros((lane_pad,), wf.dtype)])
        xf = jnp.concatenate([xf, jnp.zeros((lane_pad,), xf.dtype)])
    rows = (n + lane_pad) // lanes
    w2 = wf.reshape(rows, lanes)
    x2 = xf.reshape(rows, lanes)

    # Generation-aware tile sizing (v7x has only 64 MiB physical VMEM per TC).
    vmem_cap = 64 << 20
    try:
        vmem_cap = int(getattr(pltpu.get_tpu_info(), "vmem_capacity_bytes", vmem_cap))
    except Exception:
        pass
    tile_budget = min(vmem_cap // 2, 28 << 20)             # double-buffered input budget
    bytes_per_row_db = 2 * lanes * (w_item + x_item)        # 2 pipeline buffers per input
    max_rows_by_vmem = max(row_align, tile_budget // bytes_per_row_db)

    rows_aligned = ((rows + row_align - 1) // row_align) * row_align
    tile_rows = int(min(int(tile_rows), max_rows_by_vmem, rows_aligned))
    tile_rows = max(row_align, (tile_rows // row_align) * row_align)

    chunk_rows = math.gcd(tile_rows, 512)                   # keeps f32 temps chunk-sized
    total_tiles = -(-rows // tile_rows)
    has_ragged = (total_tiles * tile_rows * lanes != n)
    n_splits = max(1, min(int(n_splits), total_tiles))
    inner_steps = -(-total_tiles // n_splits)
    has_virtual = (n_splits * inner_steps != total_tiles)

    tgt = targets.reshape(-1, 1).astype(jnp.int32)
    batch, num_classes = logits.shape

    kernel = functools.partial(
        _cw_loss_kernel,
        c=float(c),
        inv_n_pix=1.0 / float(n),
        inv_n_batch=1.0 / float(batch),
        n_valid=n,
        tile_rows=tile_rows,
        chunk_rows=chunk_rows,
        inner_steps=inner_steps,
        total_tiles=total_tiles,
        has_ragged=has_ragged,
        has_virtual=has_virtual,
    )

    # VMEM limit from the real footprint: double-buffered inputs + chunk temporaries
    # + resident logits/targets/output + headroom (capped at physical capacity).
    inputs_bytes = 2 * tile_rows * lanes * (w_item + x_item)
    temps_bytes = 8 * chunk_rows * lanes * 4
    extras = batch * num_classes * 4 + batch * 4 + n_splits * 8 * lanes * 4 + (4 << 20)
    vmem_limit = int(min(max(inputs_bytes + temps_bytes + extras, 16 << 20), vmem_cap))

    def wx_map(s, k):
        # Clamp virtual tile indices so the DMA always targets a valid block; virtual
        # steps contribute nothing (gated/masked in-kernel).
        return (jnp.minimum(s * inner_steps + k, total_tiles - 1), 0)

    out = pl.pallas_call(
        kernel,
        out_shape=jax.ShapeDtypeStruct((n_splits, 8, lanes), jnp.float32),
        grid_spec=pltpu.PrefetchScalarGridSpec(
            num_scalar_prefetch=0,
            grid=(n_splits, inner_steps),
            in_specs=[
                pl.BlockSpec((tile_rows, lanes), wx_map),                 # w tiles
                pl.BlockSpec((tile_rows, lanes), wx_map),                 # x tiles
                pl.BlockSpec((batch, num_classes), lambda s, k: (0, 0)),  # logits (resident)
                pl.BlockSpec((batch, 1), lambda s, k: (0, 0)),            # targets (resident)
            ],
            out_specs=pl.BlockSpec((1, 8, lanes), lambda s, k: (s, 0, 0)),
        ),
        compiler_params=pltpu.CompilerParams(
            dimension_semantics=("parallel", "arbitrary"),
            vmem_limit_bytes=vmem_limit,
        ),
    )(w2, x2, logits, tgt)

    # Combine per-split partials (loss2 is already folded into split 0's block).
    return jnp.sum(out)


def _reference_loss(w, x, logits, targets, c=0.5):
    """Pure-JAX reference mirroring the PyTorch forward."""
    t = targets.reshape(-1)
    wt = 255.0 / 2.0 * (jnp.tanh(w) + 1.0)
    loss1 = jnp.mean((wt - x) ** 2)
    true_scores = jnp.take_along_axis(logits, t[:, None], axis=1)[:, 0]
    masked = logits.at[jnp.arange(logits.shape[0]), t].set(-jnp.inf)
    max_others = jnp.max(masked, axis=1)
    margin = jnp.maximum(true_scores - max_others, -10.0)
    return loss1 + c * jnp.mean(margin)


if __name__ == "__main__":
    key = jax.random.PRNGKey(0)
    kw, kx, kl, kt = jax.random.split(key, 4)

    batch, C, H, W = 2, 4, 16, 16
    num_classes = 10

    w = jax.random.normal(kw, (batch, C, H, W), dtype=jnp.float32)
    x = jax.random.uniform(kx, (batch, C, H, W), dtype=jnp.float32,
                           minval=0.0, maxval=255.0)
    logits = jax.random.normal(kl, (batch, num_classes), dtype=jnp.float32)
    targets = jax.random.randint(kt, (batch, 1), 0, num_classes, dtype=jnp.int32)

    ref = _reference_loss(w, x, logits, targets, c=0.5)

    # 1) default single-tile path
    loss = jax.block_until_ready(cw_loss(w, x, logits, targets, c=0.5))
    assert jnp.allclose(loss, ref, rtol=1e-5, atol=1e-5), (loss, ref)

    # 2) multi-tile + dual-split ("parallel") accumulator path
    loss_split = jax.block_until_ready(cw_loss(w, x, logits, targets, c=0.5, tile_rows=8))
    assert jnp.allclose(loss_split, ref, rtol=1e-5, atol=1e-5), (loss_split, ref)

    # 3) non-128-divisible element count -> in-kernel flat-index mask
    w_odd = jax.random.normal(kw, (batch, 3, 10, 10), dtype=jnp.float32)
    x_odd = jax.random.uniform(kx, (batch, 3, 10, 10), dtype=jnp.float32,
                               minval=0.0, maxval=255.0)
    ref_odd = _reference_loss(w_odd, x_odd, logits, targets, c=0.5)
    loss_odd = jax.block_until_ready(cw_loss(w_odd, x_odd, logits, targets, c=0.5))
    assert jnp.allclose(loss_odd, ref_odd, rtol=1e-5, atol=1e-5), (loss_odd, ref_odd)

    # 4) ragged rows + virtual tile + both splits active (clamped index_map path)
    w_r = jax.random.normal(kw, (1, 3, 30, 30), dtype=jnp.float32)
    x_r = jax.random.uniform(kx, (1, 3, 30, 30), dtype=jnp.float32,
                             minval=0.0, maxval=255.0)
    ref_r = _reference_loss(w_r, x_r, logits, targets, c=0.5)
    loss_r = jax.block_until_ready(cw_loss(w_r, x_r, logits, targets, c=0.5, tile_rows=8))
    assert jnp.allclose(loss_r, ref_r, rtol=1e-5, atol=1e-5), (loss_r, ref_r)

    # 5) realistic image size exercising the in-kernel chunked fori_loop streaming path
    w_big = jax.random.normal(kw, (4, 3, 224, 224), dtype=jnp.float32)
    x_big = jax.random.uniform(kx, (4, 3, 224, 224), dtype=jnp.float32,
                               minval=0.0, maxval=255.0)
    ref_big = _reference_loss(w_big, x_big, logits, targets, c=0.5)
    loss_big = jax.block_until_ready(cw_loss(w_big, x_big, logits, targets, c=0.5))
    assert jnp.allclose(loss_big, ref_big, rtol=1e-4, atol=1e-4), (loss_big, ref_big)

    print("KERNEL_OK")
</pallas_src>

<mosaic_0001>
module attributes {stable_mosaic.version = 11 : i64} {
  func.func @_cw_loss_kernel(%arg0: i32, %arg1: i32, %arg2: memref<16x128xf32, #tpu.memory_space<vmem>>, %arg3: memref<16x128xf32, #tpu.memory_space<vmem>>, %arg4: memref<2x10xf32, #tpu.memory_space<vmem>>, %arg5: memref<2x1xi32, #tpu.memory_space<vmem>>, %arg6: memref<1x8x128xf32, #tpu.memory_space<vmem>>) attributes {dimension_semantics = [#tpu.dimension_semantics<parallel>, #tpu.dimension_semantics<arbitrary>], iteration_bounds = array<i64: 1, 1>, scalar_prefetch = 0 : i64, scratch_operands = 0 : i64, tpu.core_type = #tpu.core_type<tc>, window_params = [{transform_indices = @transform_0, window_bounds = array<i64: 16, 128>}, {transform_indices = @transform_1, window_bounds = array<i64: 16, 128>}, {pipeline_mode = #tpu.pipeline_mode<synchronous>, transform_indices = @transform_2, window_bounds = array<i64: 2, 10>}, {pipeline_mode = #tpu.pipeline_mode<synchronous>, transform_indices = @transform_3, window_bounds = array<i64: 2, 1>}, {transform_indices = @transform_4, window_bounds = array<i64: 1, 8, 128>}]} {
    %c0_i32 = arith.constant 0 : i32
    %0 = arith.cmpi eq, %arg1, %c0_i32 : i32
    %1 = arith.extui %0 : i1 to i32
    %c0_i32_0 = arith.constant 0 : i32
    %2 = arith.cmpi ne, %1, %c0_i32_0 : i32
    scf.if %2 {
      %cst_17 = arith.constant 0.000000e+00 : f32
      %27 = vector.broadcast %cst_17 : f32 to vector<1x8x128xf32>
      %c0_18 = arith.constant 0 : index
      %c0_19 = arith.constant 0 : index
      %c0_20 = arith.constant 0 : index
      %28 = vector.load %arg6[%c0_18, %c0_19, %c0_20] : memref<1x8x128xf32, #tpu.memory_space<vmem>>, vector<1x8x128xf32>
      tpu.vector_store %arg6[%c0_18, %c0_19, %c0_20], %27 {strides = array<i32>} : memref<1x8x128xf32, #tpu.memory_space<vmem>>, vector<1x8x128xf32>,
    } else {
    }
    %cst = arith.constant 0.000000e+00 : f32
    %3 = vector.broadcast %cst : f32 to vector<8x128xf32>
    %c0 = arith.constant 0 : index
    %c0_1 = arith.constant 0 : index
    %4 = vector.load %arg2[%c0, %c0_1] : memref<16x128xf32, #tpu.memory_space<vmem>>, vector<16x128xf32>
    %c0_2 = arith.constant 0 : index
    %c0_3 = arith.constant 0 : index
    %5 = vector.load %arg3[%c0_2, %c0_3] : memref<16x128xf32, #tpu.memory_space<vmem>>, vector<16x128xf32>
    %6 = math.tanh %4 : vector<16x128xf32>
    %cst_4 = arith.constant 1.000000e+00 : f32
    %7 = vector.broadcast %cst_4 : f32 to vector<16x128xf32>
    %8 = arith.addf %6, %7 : vector<16x128xf32>
    %cst_5 = arith.constant 1.275000e+02 : f32
    %9 = vector.broadcast %cst_5 : f32 to vector<16x128xf32>
    %10 = arith.mulf %9, %8 : vector<16x128xf32>
    %11 = arith.subf %10, %5 : vector<16x128xf32>
    %12 = arith.mulf %11, %11 : vector<16x128xf32>
    %13 = vector.shape_cast %12 : vector<16x128xf32> to vector<2x8x128xf32>
    %cst_6 = arith.constant dense<0.000000e+00> : vector<8x128xf32>
    %14 = vector.multi_reduction <add>, %13, %cst_6 [0] : vector<2x8x128xf32> to vector<8x128xf32>
    %15 = arith.addf %3, %14 : vector<8x128xf32>
    %c0_7 = arith.constant 0 : index
    %c0_8 = arith.constant 0 : index
    %c0_9 = arith.constant 0 : index
    %16 = vector.load %arg6[%c0_7, %c0_8, %c0_9] : memref<1x8x128xf32, #tpu.memory_space<vmem>>, vector<1x8x128xf32>
    %cst_10 = arith.constant 4.8828125E-4 : f32
    %17 = vector.broadcast %cst_10 : f32 to vector<8x128xf32>
    %18 = arith.mulf %15, %17 : vector<8x128xf32>
    %19 = vector.shape_cast %18 : vector<8x128xf32> to vector<1x8x128xf32>
    %20 = arith.addf %16, %19 : vector<1x8x128xf32>
    %c0_11 = arith.constant 0 : index
    %c0_12 = arith.constant 0 : index
    %c0_13 = arith.constant 0 : index
    %21 = vector.load %arg6[%c0_11, %c0_12, %c0_13] : memref<1x8x128xf32, #tpu.memory_space<vmem>>, vector<1x8x128xf32>
    tpu.vector_store %arg6[%c0_11, %c0_12, %c0_13], %20 {strides = array<i32>} : memref<1x8x128xf32, #tpu.memory_space<vmem>>, vector<1x8x128xf32>,
    %c0_i32_14 = arith.constant 0 : i32
    %22 = arith.cmpi eq, %arg0, %c0_i32_14 : i32
    %c0_i32_15 = arith.constant 0 : i32
    %23 = arith.cmpi eq, %arg1, %c0_i32_15 : i32
    %24 = arith.andi %22, %23 : i1
    %25 = arith.extui %24 : i1 to i32
    %c0_i32_16 = arith.constant 0 : i32
    %26 = arith.cmpi ne, %25, %c0_i32_16 : i32
    scf.if %26 {
      %c0_17 = arith.constant 0 : index
      %c0_18 = arith.constant 0 : index
      %27 = vector.load %arg4[%c0_17, %c0_18] : memref<2x10xf32, #tpu.memory_space<vmem>>, vector<2x10xf32>
      %c0_19 = arith.constant 0 : index
      %c0_20 = arith.constant 0 : index
      %28 = vector.load %arg5[%c0_19, %c0_20] : memref<2x1xi32, #tpu.memory_space<vmem>>, vector<2x1xi32>
      %29 = tpu.iota {dimensions = array<i32: 1>} : vector<2x10xi32>
      %30 = vector.broadcast %28 : vector<2x1xi32> to vector<2x10xi32>
      %31 = arith.cmpi eq, %29, %30 : vector<2x10xi32>
      %cst_21 = arith.constant 0.000000e+00 : f32
      %32 = vector.broadcast %cst_21 : f32 to vector<2x10xf32>
      %33 = arith.select %31, %27, %32 : vector<2x10xi1>, vector<2x10xf32>
      %cst_22 = arith.constant dense<0.000000e+00> : vector<2xf32>
      %34 = vector.multi_reduction <add>, %33, %cst_22 [1] : vector<2x10xf32> to vector<2xf32>
      %35 = vector.shape_cast %34 : vector<2xf32> to vector<2x1xf32>
      %cst_23 = arith.constant 0xFF800000 : f32
      %36 = vector.broadcast %cst_23 : f32 to vector<2x10xf32>
      %37 = arith.select %31, %36, %27 : vector<2x10xi1>, vector<2x10xf32>
      %cst_24 = arith.constant dense<0xFF800000> : vector<2xf32>
      %38 = vector.multi_reduction <maximumf>, %37, %cst_24 [1] : vector<2x10xf32> to vector<2xf32>
      %39 = vector.shape_cast %38 : vector<2xf32> to vector<2x1xf32>
      %40 = arith.subf %35, %39 : vector<2x1xf32>
      %cst_25 = arith.constant -1.000000e+01 : f32
      %41 = vector.broadcast %cst_25 : f32 to vector<2x1xf32>
      %42 = arith.maximumf %40, %41 : vector<2x1xf32>
      %43 = vector.shape_cast %42 : vector<2x1xf32> to vector<1x2x1xf32>
      %cst_26 = arith.constant dense<0.000000e+00> : vector<1xf32>
      %44 = vector.multi_reduction <add>, %43, %cst_26 [1, 2] : vector<1x2x1xf32> to vector<1xf32>
      %45 = vector.shape_cast %44 : vector<1xf32> to vector<1x1x1xf32>
      %46 = vector.extract %45[0, 0, 0] : f32 from vector<1x1x1xf32>
      %cst_27 = arith.constant 2.500000e-01 : f32
      %47 = arith.mulf %cst_27, %46 : f32
      %48 = tpu.iota {dimensions = array<i32: 1>} : vector<1x8x128xi32>
      %49 = tpu.iota {dimensions = array<i32: 2>} : vector<1x8x128xi32>
      %c0_i32_28 = arith.constant 0 : i32
      %50 = vector.broadcast %c0_i32_28 : i32 to vector<1x8x128xi32>
      %51 = arith.cmpi eq, %48, %50 : vector<1x8x128xi32>
      %c0_i32_29 = arith.constant 0 : i32
      %52 = vector.broadcast %c0_i32_29 : i32 to vector<1x8x128xi32>
      %53 = arith.cmpi eq, %49, %52 : vector<1x8x128xi32>
      %54 = arith.andi %51, %53 : vector<1x8x128xi1>
      %c0_30 = arith.constant 0 : index
      %c0_31 = arith.constant 0 : index
      %c0_32 = arith.constant 0 : index
      %55 = vector.load %arg6[%c0_30, %c0_31, %c0_32] : memref<1x8x128xf32, #tpu.memory_space<vmem>>, vector<1x8x128xf32>
      %cst_33 = arith.constant 0.000000e+00 : f32
      %56 = vector.broadcast %47 : f32 to vector<1x8x128xf32>
      %57 = vector.broadcast %cst_33 : f32 to vector<1x8x128xf32>
      %58 = arith.select %54, %56, %57 : vector<1x8x128xi1>, vector<1x8x128xf32>
      %59 = arith.addf %55, %58 : vector<1x8x128xf32>
      %c0_34 = arith.constant 0 : index
      %c0_35 = arith.constant 0 : index
      %c0_36 = arith.constant 0 : index
      %60 = vector.load %arg6[%c0_34, %c0_35, %c0_36] : memref<1x8x128xf32, #tpu.memory_space<vmem>>, vector<1x8x128xf32>
      tpu.vector_store %arg6[%c0_34, %c0_35, %c0_36], %59 {strides = array<i32>} : memref<1x8x128xf32, #tpu.memory_space<vmem>>, vector<1x8x128xf32>,
    } else {
    }
    return
  }
  func.func @transform_0(%arg0: i32, %arg1: i32) -> (i32, i32) {
    %c1_i32 = arith.constant 1 : i32
    %0 = arith.muli %arg0, %c1_i32 : i32
    %1 = arith.addi %0, %arg1 : i32
    %c0_i32 = arith.constant 0 : i32
    %2 = arith.minsi %1, %c0_i32 : i32
    %c0_i32_0 = arith.constant 0 : i32
    %c0_i32_1 = arith.constant 0 : i32
    return %2, %c0_i32_0 : i32, i32
  }
  func.func @transform_1(%arg0: i32, %arg1: i32) -> (i32, i32) {
    %c1_i32 = arith.constant 1 : i32
    %0 = arith.muli %arg0, %c1_i32 : i32
    %1 = arith.addi %0, %arg1 : i32
    %c0_i32 = arith.constant 0 : i32
    %2 = arith.minsi %1, %c0_i32 : i32
    %c0_i32_0 = arith.constant 0 : i32
    %c0_i32_1 = arith.constant 0 : i32
    return %2, %c0_i32_0 : i32, i32
  }
  func.func @transform_2(%arg0: i32, %arg1: i32) -> (i32, i32) {
    %c0_i32 = arith.constant 0 : i32
    %c0_i32_0 = arith.constant 0 : i32
    %c0_i32_1 = arith.constant 0 : i32
    return %c0_i32, %c0_i32_0 : i32, i32
  }
  func.func @transform_3(%arg0: i32, %arg1: i32) -> (i32, i32) {
    %c0_i32 = arith.constant 0 : i32
    %c0_i32_0 = arith.constant 0 : i32
    %c0_i32_1 = arith.constant 0 : i32
    return %c0_i32, %c0_i32_0 : i32, i32
  }
  func.func @transform_4(%arg0: i32, %arg1: i32) -> (i32, i32, i32) {
    %c0_i32 = arith.constant 0 : i32
    %c0_i32_0 = arith.constant 0 : i32
    %c0_i32_1 = arith.constant 0 : i32
    return %arg0, %c0_i32, %c0_i32_0 : i32, i32, i32
  }
}

</mosaic_0001>

<llo_original>
// kernel: tpu_custom_call.1
$region0: #{tpu_custom_call.1}
  #allocation0 [shape = 'u32[]', space=smem, size = 0x4, offset = 0x4, fixed_abs, tag = 'smem constant byte address 0x4 - core index']
  #allocation1 [shape = 'u32[144,128]{1,0:T(1,128)}', space=vmem, size = 0x12000, scoped, tag = 'internal scratch']
  %s0 = inlined_call_operand.hbm [shape: f32[16,128], index: 0, kind: input, shape index: {}]
  %s1 = inlined_call_operand.hbm [shape: f32[16,128], index: 1, kind: input, shape index: {}]
  %s2 = inlined_call_operand.vmem [shape: f32[2,10], index: 2, kind: input, shape index: {}]
  %s3 = inlined_call_operand.vmem [shape: s32[2,1], index: 3, kind: input, shape index: {}]
  %s4 = inlined_call_operand.hbm [shape: f32[1,8,128], index: 4, kind: output, shape index: {}]
  %s5 = sld [smem:[#allocation0]]
  $region42: #{tpu_custom_call.1} parent=0
    _
  %s7 = ssub.s32 1, %s5
  %s8 = scalar_select 0, %s7, %s5
  $region1: #{tpu_custom_call.1} parent=0
    #allocation2 [shape = 'u8[8192]{0}', space=vmem, size = 0x2000, scoped, tag = 'input window, operand 0, single buffered']
    #allocation3 [shape = 's32[1]{0}', space=sflag, size = 0x4, scoped, tag = 'scoped memory for tpu_custom_call.1']
    #allocation4 [shape = 's32[1]{0}', space=sflag, size = 0x4, scoped, tag = 'scoped memory for tpu_custom_call.1']
    #allocation5 [shape = 'u8[8192]{0}', space=vmem, size = 0x2000, scoped, tag = 'input window, operand 1, single buffered']
    #allocation6 [shape = 's32[1]{0}', space=sflag, size = 0x4, scoped, tag = 'scoped memory for tpu_custom_call.1']
    #allocation7 [shape = 'u8[4096]{0}', space=vmem, size = 0x1000, scoped, tag = 'output window, operand 0, single buffered']
    %9 = vsyncpa [#allocation3], 0
    %10 = vsyncpa [#allocation6], 0
    %11 = vsyncpa [#allocation4], 0
    // Predicated region
    $region2: #{tpu_custom_call.1} parent=1 // pred_check
      _
    $region3: #{tpu_custom_call.1} parent=1 // pred_check_branch
      %13 = sbr.rel (0) target = $region5
    $region4: #{tpu_custom_call.1} parent=1 // pred_region
      %s14 = sadd.s32 0, 0
      %p15 = scmp.lt.s32.totalorder %s14, 0
      %s16 = scalar_select %p15, %s14, 0
      %s17 = smul.u32 2, %s16
      %s19 = ssub.s32 256, 256
      %20 = vsyncadd [#allocation3], %s19
      %s21 = smul.addr %s17, 128
      %s22 = scalar_lea.hbm %s0, %s21
      %s23 = sshll.u32 [#allocation2], 4
      %s24 = int_to_ptr.vmem [resolvable:$true] %s23
      %29 = dma.hbm_to_vmem [thread:$0]  %s22, 256, %s24, [#allocation3], 128, 128, 8
    $region5: #{tpu_custom_call.1} parent=1 // pred_fallthru
      _
    // Predicated region
    $region6: #{tpu_custom_call.1} parent=1 // pred_check
      _
    $region7: #{tpu_custom_call.1} parent=1 // pred_check_branch
      %31 = sbr.rel (0) target = $region9
    $region8: #{tpu_custom_call.1} parent=1 // pred_region
      %s32 = sadd.s32 0, 0
      %p33 = scmp.lt.s32.totalorder %s32, 0
      %s34 = scalar_select %p33, %s32, 0
      %s35 = smul.u32 2, %s34
      %s37 = ssub.s32 256, 256
      %38 = vsyncadd [#allocation6], %s37
      %s39 = smul.addr %s35, 128
      %s40 = scalar_lea.hbm %s1, %s39
      %s41 = sshll.u32 [#allocation5], 4
      %s42 = int_to_ptr.vmem [resolvable:$true] %s41
      %47 = dma.hbm_to_vmem [thread:$0]  %s40, 256, %s42, [#allocation6], 128, 128, 8
    $region9: #{tpu_custom_call.1} parent=1 // pred_fallthru
      _
    // Predicated region
    $region10: #{tpu_custom_call.1} parent=1 // pred_check
      _
    $region11: #{tpu_custom_call.1} parent=1 // pred_check_branch
      %49 = sbr.rel (0) target = $region13
    $region12: #{tpu_custom_call.1} parent=1 // pred_region
      _
    $region13: #{tpu_custom_call.1} parent=1 // pred_fallthru
      _
    // Predicated region
    $region14: #{tpu_custom_call.1} parent=1 // pred_check
      _
    $region15: #{tpu_custom_call.1} parent=1 // pred_check_branch
      %51 = sbr.rel (0) target = $region17
    $region16: #{tpu_custom_call.1} parent=1 // pred_region
      _
    $region17: #{tpu_custom_call.1} parent=1 // pred_fallthru
      _
    // Predicated region
    $region18: #{tpu_custom_call.1} parent=1 // pred_check
      _
    $region19: #{tpu_custom_call.1} parent=1 // pred_check_branch
      %53 = sbr.rel (0) target = $region21
    $region20: #{tpu_custom_call.1} parent=1 // pred_region
      %54 = dma.done [#allocation3], 256
    $region21: #{tpu_custom_call.1} parent=1 // pred_fallthru
      _
    // Predicated region
    $region22: #{tpu_custom_call.1} parent=1 // pred_check
      _
    $region23: #{tpu_custom_call.1} parent=1 // pred_check_branch
      %56 = sbr.rel (0) target = $region25
    $region24: #{tpu_custom_call.1} parent=1 // pred_region
      %57 = dma.done [#allocation6], 256
    $region25: #{tpu_custom_call.1} parent=1 // pred_fallthru
      _
    %s58 = sadd.s32 0, 0
    %p59 = scmp.lt.s32.totalorder %s58, 0
    %s60 = scalar_select %p59, %s58, 0
    %s61 = smul.u32 2, %s60
    %s62 = sadd.s32 0, 0
    %p63 = scmp.lt.s32.totalorder %s62, 0
    %s64 = scalar_select %p63, %s62, 0
    %s65 = smul.u32 2, %s64
    %p66 = scmp.eq.s32.totalorder 0, 0
    // Predicated region
    $region26: #{tpu_custom_call.1} parent=1 // pred_check
      %p67 = pneg %p66
    $region27: #{tpu_custom_call.1} parent=1 // pred_check_branch
      %69 = sbr.rel (%p67) target = $region29
    $region28: #{tpu_custom_call.1} parent=1 // pred_region
      %70 = vst [vmem:[#allocation7] sm:$0xff] 0.0
    $region29: #{tpu_custom_call.1} parent=1 // pred_fallthru
      _
    %v71 = vld [vmem:[#allocation2] sm:$0xff]
    %v72 = vld [vmem:[#allocation2 + $0x8] sm:$0xff]
    %v73 = vld [vmem:[#allocation5] sm:$0xff]
    %v74 = vld [vmem:[#allocation5 + $0x8] sm:$0xff]
    %v75 = vtanh.pop %v71
    %v76 = vtanh.pop %v72
    %v77 = vadd.f32 %v75, 1.0
    %v78 = vadd.f32 %v76, 1.0
    %v79 = vmul.f32 %v77, 127.5
    %v80 = vmul.f32 %v78, 127.5
    %v81 = vsub.f32 %v79, %v73
    %v82 = vsub.f32 %v80, %v74
    %v83 = vmul.f32 %v81, %v81
    %v84 = vmul.f32 %v82, %v82
    %v85 = vadd.f32 %v83, %v84
    %v86 = vadd.f32 %v85, 0.0
    %v87 = vld [vmem:[#allocation7] sm:$0xff]
    %v88 = vmul.f32 %v86, 0.00048828125
    %v89 = vadd.f32 %v87, %v88
    %90 = vst [vmem:[#allocation7] sm:$0xff] %v89
    %p91 = scmp.eq.s32.totalorder 0, 0
    %p92 = pnand %p91, %p66
    %p93 = pneg %p92
    // Predicated region
    $region30: #{tpu_custom_call.1} parent=1 // pred_check
      _
    $region31: #{tpu_custom_call.1} parent=1 // pred_check_branch
      %95 = sbr.rel (%p92) target = $region33
    $region32: #{tpu_custom_call.1} parent=1 // pred_region
      %v96 = vld [vmem:[%s2] sm:$0x3]
      %v97 = vld [vmem:[%s3] sm:$0x3]
      %v98 = vlaneseq
      %v99 = vand.u32 %v98, 127
      %100 = vset.pattern.permute.xlu0 0
      %101 = vperm.xlu0 %100, %v97
      %v102 = vpop.permute.xlu0 %101
      %vm103 = vcmp.eq.s32.totalorder %v99, %v102
      %v104 = vsel %vm103, %v96, 0.0
      %vm105 = vcmask 74752
      %v106 = vsel %vm105, %v104, 0.0
      %107 = vadd.xlane.f32.xlu0 %v106
      %v108 = vpop.xlane.xlu0 %107
      %v109 = vsel %vm103, -inf, %v96
      %v110 = vsel %vm105, %v109, -inf
      %111 = vmax.xlane.f32.xlu0 %v110
      %v112 = vpop.xlane.xlu0 %111
      %v113 = vsub.f32 %v108, %v112
      %v114 = vmax.f32 %v113, -10.0
      %vm115 = vcmask 1024
      %v116 = vsel %vm115, %v114, 0.0
      %117 = vadd.xlane.f32.xlu0 %v116
      %v118 = vpop.xlane.xlu0 %117
      %v119 = vrot.slane %v118, 4
      %v120 = vadd.f32 %v118, %v119
      %v121 = vrot.slane %v120, 2
      %v122 = vadd.f32 %v120, %v121
      %v123 = vrot.slane %v122, 1
      %v124 = vadd.f32 %v122, %v123
      %s125 = vtos %v124
      %s126 = smul.f32 %s125, 0.25
      %v127 = vlaneseq
      %v128 = vshrl.u32 %v127, 7
      %vm129 = vcmp.eq.s32.totalorder %v128, 0
      %vm130 = vcmp.eq.s32.totalorder %v99, 0
      %vm131 = vmand %vm129, %vm130
      %v132 = vld [vmem:[#allocation7] sm:$0xff]
      %v133 = vstv %s126
      %v134 = vsel %vm131, %v133, 0.0
      %v135 = vadd.f32 %v132, %v134
      %136 = vst [vmem:[#allocation7] sm:$0xff] %v135
    $region33: #{tpu_custom_call.1} parent=1 // pred_fallthru
      _
    // Predicated region
    $region34: #{tpu_custom_call.1} parent=1 // pred_check
      _
    $region35: #{tpu_custom_call.1} parent=1 // pred_check_branch
      %138 = sbr.rel (0) target = $region37
    $region36: #{tpu_custom_call.1} parent=1 // pred_region
      %s140 = ssub.s32 128, 128
      %141 = vsyncadd [#allocation4], %s140
      %s143 = sshll.u32 [#allocation7], 4
      %s144 = int_to_ptr.vmem [resolvable:$true] %s143
      %146 = dma.vmem_to_hbm [thread:$0]  %s144, 128, %s4, [#allocation4]
    $region37: #{tpu_custom_call.1} parent=1 // pred_fallthru
      _
    // Predicated region
    $region38: #{tpu_custom_call.1} parent=1 // pred_check
      _
    $region39: #{tpu_custom_call.1} parent=1 // pred_check_branch
      %148 = sbr.rel (0) target = $region41
    $region40: #{tpu_custom_call.1} parent=1 // pred_region
      %149 = dma.done [#allocation4], 128
    $region41: #{tpu_custom_call.1} parent=1 // pred_fallthru
      _
    %150 = vsyncpa [#allocation3], 1
    %151 = vsyncpa [#allocation6], 1
    %152 = vsyncpa [#allocation4], 1

</llo_original>
